<compile_context>
chip_gen: v5e
topology: v5e:2x2
jax: 0.10.0
libtpu: 0.0.40
codegen_flags: <defaults>
</compile_context>

<pallas_src>
import jax
import jax.numpy as jnp
from jax.experimental import pallas as pl
from jax.experimental.pallas import tpu as pltpu


_LANE = 128
# Per-buffer tile target.  8 MiB => 32 MiB of double-buffered in+out buffers:
# comfortable on v5e/v6e (128 MiB VMEM) and within v7x's 64 MiB, and deep into
# the measured >=95%-of-roofline plateau for copies on v6e.
_TARGET_TILE_BYTES = 8 * 1024 * 1024
# Don't split into multiple blocks if blocks would drop below ~1 MiB (below
# that, launch/prologue dominates and splitting only adds per-step overhead).
_MIN_SPLIT_TILE_BYTES = 1 * 1024 * 1024


def _round_up(a, b):
    return -(-a // b) * b


def _round_down(a, b):
    return (a // b) * b


def _sublane_min(dtype):
    """Minimum second-to-last block dim for this dtype (sublane packing)."""
    itemsize = jnp.dtype(dtype).itemsize
    if itemsize == 1:
        return 32
    if itemsize == 2:
        return 16
    return 8


def _pick_tile_rows(n_rows, sublane, itemsize):
    """Rows per block for a (n_rows, 128) copy.

    * multiple of the dtype's sublane packing (or == n_rows when smaller);
    * ~_TARGET_TILE_BYTES per buffer so the ~0.35 us per-step pipeline cost is
      amortized;
    * capped so large arrays produce >= 4 grid steps: with
      dimension_semantics=("parallel",) v7x's two TensorCores then each get
      >= 2 blocks (each TC has its own DMA path to HBM).  Harmless no-op on
      v5e/v6e (1 TC) since blocks stay >= ~1 MiB.
    """
    if n_rows <= sublane:
        return n_rows                                   # full-extent block
    row_bytes = _LANE * itemsize
    target = _round_down(max(sublane, _TARGET_TILE_BYTES // row_bytes), sublane)
    quarter = _round_up(-(-n_rows // 4), sublane)       # ~cdiv(R, 4)
    floor = _round_down(max(sublane, _MIN_SPLIT_TILE_BYTES // row_bytes), sublane)
    tile = min(target, max(quarter, floor))
    tile = max(tile, sublane)
    return min(tile, _round_down(n_rows, sublane))


def _copy_kernel(x_ref, o_ref):
    # Pure identity copy of the current tile (VMEM in -> VMEM out).
    o_ref[...] = x_ref[...]


def _pallas_copy_2d(x2d, *, input_may_fuse=False):
    """Materialized copy of a (R, 128)-shaped array through a tiled Pallas kernel."""
    R, C = x2d.shape
    assert C == _LANE
    itemsize = jnp.dtype(x2d.dtype).itemsize
    sublane = _sublane_min(x2d.dtype)

    tile_rows = _pick_tile_rows(R, sublane, itemsize)
    grid = (pl.cdiv(R, tile_rows),)   # ragged last block is masked by Pallas

    tile_bytes = tile_rows * C * itemsize
    # 2 double-buffered buffers each for input and output, plus headroom.
    vmem_limit = max(4 * tile_bytes + (4 << 20), 16 << 20)
    nbytes = R * C * itemsize         # kernel-accessed bytes (padded if padded)

    return pl.pallas_call(
        _copy_kernel,
        out_shape=jax.ShapeDtypeStruct((R, C), x2d.dtype),
        grid_spec=pltpu.PrefetchScalarGridSpec(
            num_scalar_prefetch=0,
            grid=grid,
            in_specs=[pl.BlockSpec((tile_rows, C), lambda i: (i, 0))],
            out_specs=pl.BlockSpec((tile_rows, C), lambda i: (i, 0)),
        ),
        compiler_params=pltpu.CompilerParams(
            dimension_semantics=("parallel",),   # independent tiles -> megacore
            vmem_limit_bytes=vmem_limit,
            # Lets XLA fuse a producing pad op into the operand (unaligned path).
            allow_input_fusion=[True] if input_may_fuse else None,
        ),
        cost_estimate=pl.CostEstimate(
            flops=0, transcendentals=0, bytes_accessed=2 * nbytes
        ),
    )(x2d)


def reshape_forward(x, shape, *, force_copy=False):
    """Equivalent of Reshape(*shape).forward(x): returns x.reshape([-1, *shape]).

    Default: metadata-only reshape (exactly what torch.reshape does on a
    contiguous tensor) -- zero HBM traffic, no kernel launch.  This is also the
    small-tensor guard: nothing below (or above) any size threshold ever pays
    for a copy unless one is explicitly requested.

    force_copy=True: the data is additionally pushed through a tiled,
    lane-dense Pallas copy kernel (2N bytes of HBM traffic) before the
    metadata reshape -- useful when a freshly materialized buffer is required.
    """
    out_shape = (-1,) + tuple(shape)
    if not force_copy or x.size == 0:
        return x.reshape(out_shape)

    n = x.size
    flat = x.reshape(-1)                      # metadata-only
    rows, rem = divmod(n, _LANE)

    if rem == 0:
        # Aligned fast path (common NCHW case): exactly 2N HBM bytes, no pad,
        # no slice.  Ragged row counts are handled by the cdiv grid + masking.
        y2d = _pallas_copy_2d(flat.reshape(rows, _LANE))
        return y2d.reshape(out_shape)

    # Unaligned total size (< 128-element tail): pad the last lane row; the pad
    # is allowed to fuse into the pallas_call operand, leaving only the small
    # trailing slice as an extra pass.
    # TODO(synk): fold the tail into the kernel via a manual memory_space=pl.ANY
    # DMA so the trailing slice disappears as well.
    rows = rows + 1
    padded = jnp.pad(flat, (0, rows * _LANE - n))
    y2d = _pallas_copy_2d(padded.reshape(rows, _LANE), input_may_fuse=True)
    return y2d.reshape(-1)[:n].reshape(out_shape)


class Reshape:
    """Drop-in analogue of the PyTorch module."""

    def __init__(self, *shape):
        self.shape = tuple(shape)

    def __call__(self, x, *, force_copy=False):
        return reshape_forward(x, self.shape, force_copy=force_copy)


if __name__ == "__main__":
    key = jax.random.PRNGKey(0)

    # VAE-style use: Reshape(4, 256) on an NCHW feature map (2, 4, 16, 16).
    x = jax.random.normal(key, (2, 4, 16, 16), dtype=jnp.float32)
    mod = Reshape(4, 256)
    ref = x.reshape((-1, 4, 256))

    # 1) Default path: metadata-only reshape (no kernel).
    y_view = jax.block_until_ready(mod(x))
    assert y_view.shape == ref.shape and y_view.dtype == ref.dtype
    assert bool(jnp.array_equal(y_view, ref))

    # 2) Forced materialized copy: runs the Pallas kernel (128-aligned path).
    y_copy = jax.block_until_ready(mod(x, force_copy=True))
    assert y_copy.shape == ref.shape and y_copy.dtype == ref.dtype
    assert bool(jnp.array_equal(y_copy, ref))

    # 3) bf16, multi-block grid with a masked ragged last block
    #    (rows=40, sublane packing=16 -> blocks of 32 + 8 valid rows).
    xb = jax.random.normal(key, (40, 128), dtype=jnp.bfloat16)
    refb = xb.reshape((-1, 80))
    yb = jax.block_until_ready(reshape_forward(xb, (80,), force_copy=True))
    assert yb.shape == refb.shape and yb.dtype == refb.dtype
    assert bool(jnp.array_equal(yb, refb))

    # 4) Unaligned element count (105 elements, bf16) through the padded path.
    xc = jax.random.normal(key, (3, 5, 7), dtype=jnp.bfloat16)
    refc = xc.reshape((-1, 35))
    yc = jax.block_until_ready(reshape_forward(xc, (35,), force_copy=True))
    assert yc.shape == refc.shape and yc.dtype == refc.dtype
    assert bool(jnp.array_equal(yc, refc))

    print("KERNEL_OK")
</pallas_src>

<mosaic_0001>
module attributes {stable_mosaic.version = 11 : i64} {
  func.func @_copy_kernel(%arg0: i32, %arg1: memref<16x128xf32, #tpu.memory_space<vmem>>, %arg2: memref<16x128xf32, #tpu.memory_space<vmem>>) attributes {dimension_semantics = [#tpu.dimension_semantics<parallel>], iteration_bounds = array<i64: 1>, scalar_prefetch = 0 : i64, scratch_operands = 0 : i64, tpu.core_type = #tpu.core_type<tc>, window_params = [{transform_indices = @transform_0, window_bounds = array<i64: 16, 128>}, {transform_indices = @transform_1, window_bounds = array<i64: 16, 128>}]} {
    %c0 = arith.constant 0 : index
    %c0_0 = arith.constant 0 : index
    %0 = vector.load %arg1[%c0, %c0_0] : memref<16x128xf32, #tpu.memory_space<vmem>>, vector<16x128xf32>
    %c0_1 = arith.constant 0 : index
    %c0_2 = arith.constant 0 : index
    %1 = vector.load %arg2[%c0_1, %c0_2] : memref<16x128xf32, #tpu.memory_space<vmem>>, vector<16x128xf32>
    tpu.vector_store %arg2[%c0_1, %c0_2], %0 {strides = array<i32>} : memref<16x128xf32, #tpu.memory_space<vmem>>, vector<16x128xf32>,
    return
  }
  func.func @transform_0(%arg0: i32) -> (i32, i32) {
    %c0_i32 = arith.constant 0 : i32
    %c0_i32_0 = arith.constant 0 : i32
    return %arg0, %c0_i32 : i32, i32
  }
  func.func @transform_1(%arg0: i32) -> (i32, i32) {
    %c0_i32 = arith.constant 0 : i32
    %c0_i32_0 = arith.constant 0 : i32
    return %arg0, %c0_i32 : i32, i32
  }
}

</mosaic_0001>

<llo_original>
// kernel: tpu_custom_call.1
$region0: #{tpu_custom_call.1}
  #allocation0 [shape = 'u32[]', space=smem, size = 0x4, offset = 0x4, fixed_abs, tag = 'smem constant byte address 0x4 - core index']
  #allocation1 [shape = 'u32[72,128]{1,0:T(1,128)}', space=vmem, size = 0x9000, scoped, tag = 'internal scratch']
  %s0 = inlined_call_operand.hbm [shape: f32[16,128], index: 0, kind: input, shape index: {}]
  %s1 = inlined_call_operand.hbm [shape: f32[16,128], index: 1, kind: output, shape index: {}]
  %s2 = sld [smem:[#allocation0]]
  $region18: #{tpu_custom_call.1} parent=0
    _
  %s4 = ssub.s32 1, %s2
  %s5 = scalar_select 0, %s4, %s2
  $region1: #{tpu_custom_call.1} parent=0
    #allocation2 [shape = 'u8[8192]{0}', space=vmem, size = 0x2000, scoped, tag = 'input window, operand 0, single buffered']
    #allocation3 [shape = 's32[1]{0}', space=sflag, size = 0x4, scoped, tag = 'scoped memory for tpu_custom_call.1']
    #allocation4 [shape = 's32[1]{0}', space=sflag, size = 0x4, scoped, tag = 'scoped memory for tpu_custom_call.1']
    #allocation5 [shape = 'u8[8192]{0}', space=vmem, size = 0x2000, scoped, tag = 'output window, operand 0, single buffered']
    %6 = vsyncpa [#allocation3], 0
    %7 = vsyncpa [#allocation4], 0
    // Predicated region
    $region2: #{tpu_custom_call.1} parent=1 // pred_check
      _
    $region3: #{tpu_custom_call.1} parent=1 // pred_check_branch
      %9 = sbr.rel (0) target = $region5
    $region4: #{tpu_custom_call.1} parent=1 // pred_region
      %11 = vsyncadd [#allocation3], 0
      %s12 = sshll.u32 %s0, 4
      %s13 = int_to_ptr.hbm [resolvable:$true] %s12
      %s14 = sshll.u32 [#allocation2], 4
      %s15 = int_to_ptr.vmem [resolvable:$true] %s14
      %20 = dma.hbm_to_vmem [thread:$0]  %s13, 256, %s15, [#allocation3], 128, 128, 8
    $region5: #{tpu_custom_call.1} parent=1 // pred_fallthru
      _
    // Predicated region
    $region6: #{tpu_custom_call.1} parent=1 // pred_check
      _
    $region7: #{tpu_custom_call.1} parent=1 // pred_check_branch
      %22 = sbr.rel (0) target = $region9
    $region8: #{tpu_custom_call.1} parent=1 // pred_region
      %24 = dma.done [#allocation3], 256
    $region9: #{tpu_custom_call.1} parent=1 // pred_fallthru
      _
    %v25 = vld [vmem:[#allocation2] sm:$0xff]
    %v26 = vld [vmem:[#allocation2 + $0x8] sm:$0xff]
    %27 = vst [vmem:[#allocation5] sm:$0xff] %v25
    %28 = vst [vmem:[#allocation5 + $0x8] sm:$0xff] %v26
    // Predicated region
    $region10: #{tpu_custom_call.1} parent=1 // pred_check
      _
    $region11: #{tpu_custom_call.1} parent=1 // pred_check_branch
      %30 = sbr.rel (0) target = $region13
    $region12: #{tpu_custom_call.1} parent=1 // pred_region
      %32 = vsyncadd [#allocation4], 0
      %s33 = sshll.u32 [#allocation5], 4
      %s34 = int_to_ptr.vmem [resolvable:$true] %s33
      %s35 = sshll.u32 %s1, 4
      %s36 = int_to_ptr.hbm [resolvable:$true] %s35
      %41 = dma.vmem_to_hbm [thread:$0]  %s34, 256, %s36, [#allocation4], 128, 128, 8
    $region13: #{tpu_custom_call.1} parent=1 // pred_fallthru
      _
    // Predicated region
    $region14: #{tpu_custom_call.1} parent=1 // pred_check
      _
    $region15: #{tpu_custom_call.1} parent=1 // pred_check_branch
      %43 = sbr.rel (0) target = $region17
    $region16: #{tpu_custom_call.1} parent=1 // pred_region
      %45 = dma.done [#allocation4], 256
    $region17: #{tpu_custom_call.1} parent=1 // pred_fallthru
      _
    %46 = vsyncpa [#allocation3], 1
    %47 = vsyncpa [#allocation4], 1

</llo_original>
